<compile_context>
chip_gen: v5e
topology: v5e:2x2
jax: 0.10.0
libtpu: 0.0.40
codegen_flags: <defaults>
</compile_context>

<pallas_src>
import functools

import jax
import jax.numpy as jnp
from jax.experimental import pallas as pl
from jax.experimental.pallas import tpu as pltpu

LOG_STD_MAX = 2.0
LOG_STD_MIN = -5.0

HID1 = 256
HID2 = 128


def _round_up(x, m):
    return ((x + m - 1) // m) * m


def _choose_tile_m(b_pad, tm_max):
    """Pick the batch tile: big enough to amortize ~0.35us/step overhead, small
    enough that the grid has >=2 steps (v7x megacore) with <~15% padding waste.
    Tiny batches (latency path) use a single tile."""
    if b_pad <= 128:
        return b_pad
    for t in (2048, 1024, 512, 256, 128, 64):
        if t > tm_max:
            continue
        padded = _round_up(b_pad, t)
        if padded // t >= 2 and (padded - b_pad) <= 0.15 * padded:
            return t
    # Fall back to a single (or few) large tile(s) with minimal padding.
    return min(b_pad, _round_up(tm_max, 8))


def actor_forward_kernel(x_ref, w1_ref, b1_ref, w2_ref, b2_ref,
                         wh_ref, bh_ref, mean_ref, logstd_ref, *,
                         out_dim, half):
    # One batch tile per grid step; weights/biases are VMEM-resident across
    # the whole grid (constant index_map).
    x = x_ref[...]

    # fc1 + relu (MXU matmul, f32 accumulation; elementwise in f32).
    h1 = jnp.dot(x, w1_ref[...], preferred_element_type=jnp.float32) + b1_ref[...]
    h1 = jnp.maximum(h1, 0.0)

    # fc2 + relu.
    h2 = jnp.dot(h1.astype(w2_ref.dtype), w2_ref[...],
                 preferred_element_type=jnp.float32) + b2_ref[...]
    h2 = jnp.maximum(h2, 0.0)

    # Fused heads: columns [0, out_dim) = mean, [half, half+out_dim) = log_std
    # (half is a multiple of 128, so the two heads occupy lane-aligned blocks).
    head = jnp.dot(h2.astype(wh_ref.dtype), wh_ref[...],
                   preferred_element_type=jnp.float32) + bh_ref[...]

    mean_ref[...] = head[:, :out_dim].astype(mean_ref.dtype)

    # log_std squash (tanh -> affine into [LOG_STD_MIN, LOG_STD_MAX]); tanh runs
    # on the EUP slot, cheap next to the memory-bound writeback.
    log_raw = head[:, half:half + out_dim]
    log_std = LOG_STD_MIN + 0.5 * (LOG_STD_MAX - LOG_STD_MIN) * (jnp.tanh(log_raw) + 1.0)
    logstd_ref[...] = log_std.astype(logstd_ref.dtype)


def prepare_actor_params(params, *, compute_dtype=jnp.bfloat16):
    """One-time packing/casting of the Actor parameters.

    Packs Wm / Ws column-wise into a single lane-dense head weight (mean in
    lanes [0, out_dim), log_std in lanes [half, half+out_dim)) and casts the
    MXU inputs to `compute_dtype` (bf16 recommended on v5e/v6e/v7x; all
    accumulation and elementwise math stay f32). Call once; reuse per forward.
    """
    w1, b1, w2, b2, wm, bm, ws, bs = params
    in_dim, out_dim = w1.shape[0], wm.shape[1]
    half = max(128, _round_up(out_dim, 128))

    wh = jnp.zeros((HID2, 2 * half), jnp.float32)
    wh = wh.at[:, :out_dim].set(wm).at[:, half:half + out_dim].set(ws)
    bh = jnp.zeros((1, 2 * half), jnp.float32)
    bh = bh.at[:, :out_dim].set(bm.reshape(-1)).at[:, half:half + out_dim].set(bs.reshape(-1))

    return {
        "w1": jnp.asarray(w1, compute_dtype), "b1": jnp.asarray(b1, jnp.float32),
        "w2": jnp.asarray(w2, compute_dtype), "b2": jnp.asarray(b2, jnp.float32),
        "wh": wh.astype(compute_dtype), "bh": bh,
        "in_dim": in_dim, "out_dim": out_dim, "half": half,
        "compute_dtype": compute_dtype,
    }


def actor_forward(x, prep, *, tm=1024):
    """x: (B, input_shape) float32; prep: output of prepare_actor_params.
    Returns (mean, log_std), each (B, output_shape) float32."""
    B, in_dim = x.shape
    assert in_dim == prep["in_dim"]
    out_dim, half = prep["out_dim"], prep["half"]
    compute_dtype = prep["compute_dtype"]

    # Batch tiling: pad B to a sublane multiple, then to a multiple of the tile.
    b_pad = _round_up(max(B, 8), 8)
    tile_m = _choose_tile_m(b_pad, tm)
    b_pad = _round_up(b_pad, tile_m)
    if b_pad != B:
        x = jnp.pad(x, ((0, b_pad - B), (0, 0)))
    x_c = x.astype(compute_dtype)

    grid = (b_pad // tile_m,)
    # Constant index_map -> weights/biases stay VMEM-resident across the grid
    # (verified via pl.lower_as_mlir: no per-step re-DMA of these operands).
    resident = lambda a: pl.BlockSpec(a.shape, lambda i: (0,) * a.ndim)

    mean, log_std = pl.pallas_call(
        functools.partial(actor_forward_kernel, out_dim=out_dim, half=half),
        out_shape=(jax.ShapeDtypeStruct((b_pad, out_dim), jnp.float32),
                   jax.ShapeDtypeStruct((b_pad, out_dim), jnp.float32)),
        grid=grid,
        in_specs=[
            pl.BlockSpec((tile_m, in_dim), lambda i: (i, 0)),   # x tile (pipelined)
            resident(prep["w1"]), resident(prep["b1"]),
            resident(prep["w2"]), resident(prep["b2"]),
            resident(prep["wh"]), resident(prep["bh"]),
        ],
        out_specs=(pl.BlockSpec((tile_m, out_dim), lambda i: (i, 0)),   # narrow writeback
                   pl.BlockSpec((tile_m, out_dim), lambda i: (i, 0))),
        compiler_params=pltpu.CompilerParams(
            dimension_semantics=("parallel",)),                  # megacore split on v7x
    )(x_c, prep["w1"], prep["b1"], prep["w2"], prep["b2"], prep["wh"], prep["bh"])

    return mean[:B], log_std[:B]


def init_actor_params(key, input_shape, output_shape):
    """Deterministic synthetic parameter init (weights stored as (in, out))."""
    ks = jax.random.split(key, 8)

    def linear(kw, kb, fan_in, fan_out):
        bound = 1.0 / jnp.sqrt(fan_in)
        w = jax.random.uniform(kw, (fan_in, fan_out), jnp.float32, -bound, bound)
        b = jax.random.uniform(kb, (1, fan_out), jnp.float32, -bound, bound)
        return w, b

    w1, b1 = linear(ks[0], ks[1], input_shape, HID1)
    w2, b2 = linear(ks[2], ks[3], HID1, HID2)
    wm, bm = linear(ks[4], ks[5], HID2, output_shape)
    ws, bs = linear(ks[6], ks[7], HID2, output_shape)
    return (w1, b1, w2, b2, wm, bm, ws, bs)


def actor_forward_ref(x, params):
    """Pure-JAX reference for correctness checking."""
    w1, b1, w2, b2, wm, bm, ws, bs = params
    h1 = jax.nn.relu(x @ w1 + b1)
    h2 = jax.nn.relu(h1 @ w2 + b2)
    mean = h2 @ wm + bm
    log_std = jnp.tanh(h2 @ ws + bs)
    log_std = LOG_STD_MIN + 0.5 * (LOG_STD_MAX - LOG_STD_MIN) * (log_std + 1.0)
    return mean, log_std


if __name__ == "__main__":
    key = jax.random.PRNGKey(0)
    k_param, k_x, k_x2 = jax.random.split(key, 3)

    batch = 8          # observation batch
    input_shape = 32   # observation dim
    output_shape = 4   # action dim

    params = init_actor_params(k_param, input_shape, output_shape)
    x = jax.random.normal(k_x, (batch, input_shape), dtype=jnp.float32)
    mean_ref, log_std_ref = actor_forward_ref(x, params)

    # Exact f32-MXU path.
    prep_f32 = prepare_actor_params(params, compute_dtype=jnp.float32)
    mean, log_std = actor_forward(x, prep_f32)
    jax.block_until_ready((mean, log_std))
    assert mean.shape == (batch, output_shape)
    assert log_std.shape == (batch, output_shape)
    assert jnp.allclose(mean, mean_ref, atol=1e-4, rtol=1e-4)
    assert jnp.allclose(log_std, log_std_ref, atol=1e-4, rtol=1e-4)

    # bf16-MXU-input fast path (recommended on v5e/v6e/v7x; f32 accumulation).
    prep_bf16 = prepare_actor_params(params, compute_dtype=jnp.bfloat16)
    mean_bf, log_std_bf = actor_forward(x, prep_bf16)
    jax.block_until_ready((mean_bf, log_std_bf))
    assert jnp.allclose(mean_bf, mean_ref, atol=5e-2, rtol=5e-2)
    assert jnp.allclose(log_std_bf, log_std_ref, atol=5e-2, rtol=5e-2)

    # Multi-tile throughput path: grid >= 2 (both TCs on v7x) + padded tail tile.
    xb = jax.random.normal(k_x2, (1000, input_shape), dtype=jnp.float32)
    mean_b, log_std_b = actor_forward(xb, prep_f32)
    jax.block_until_ready((mean_b, log_std_b))
    mean_b_ref, log_std_b_ref = actor_forward_ref(xb, params)
    assert mean_b.shape == (1000, output_shape)
    assert jnp.allclose(mean_b, mean_b_ref, atol=1e-4, rtol=1e-4)
    assert jnp.allclose(log_std_b, log_std_b_ref, atol=1e-4, rtol=1e-4)

    # TODO(synk): get_action() sampling path (torch.distributions rsample/log_prob,
    # action_scale/action_bias rescaling) is not part of forward() and is not
    # implemented here.
    print("KERNEL_OK")
</pallas_src>

<mosaic_0001>
module attributes {stable_mosaic.version = 11 : i64} {
  func.func @actor_forward_kernel(%arg0: i32, %arg1: memref<8x32xf32, #tpu.memory_space<vmem>>, %arg2: memref<32x256xf32, #tpu.memory_space<vmem>>, %arg3: memref<1x256xf32, #tpu.memory_space<vmem>>, %arg4: memref<256x128xf32, #tpu.memory_space<vmem>>, %arg5: memref<1x128xf32, #tpu.memory_space<vmem>>, %arg6: memref<128x256xf32, #tpu.memory_space<vmem>>, %arg7: memref<1x256xf32, #tpu.memory_space<vmem>>, %arg8: memref<8x4xf32, #tpu.memory_space<vmem>>, %arg9: memref<8x4xf32, #tpu.memory_space<vmem>>) attributes {dimension_semantics = [#tpu.dimension_semantics<parallel>], iteration_bounds = array<i64: 1>, scalar_prefetch = 0 : i64, scratch_operands = 0 : i64, tpu.core_type = #tpu.core_type<tc>, window_params = [{transform_indices = @transform_0, window_bounds = array<i64: 8, 32>}, {pipeline_mode = #tpu.pipeline_mode<synchronous>, transform_indices = @transform_1, window_bounds = array<i64: 32, 256>}, {pipeline_mode = #tpu.pipeline_mode<synchronous>, transform_indices = @transform_2, window_bounds = array<i64: 1, 256>}, {pipeline_mode = #tpu.pipeline_mode<synchronous>, transform_indices = @transform_3, window_bounds = array<i64: 256, 128>}, {pipeline_mode = #tpu.pipeline_mode<synchronous>, transform_indices = @transform_4, window_bounds = array<i64: 1, 128>}, {pipeline_mode = #tpu.pipeline_mode<synchronous>, transform_indices = @transform_5, window_bounds = array<i64: 128, 256>}, {pipeline_mode = #tpu.pipeline_mode<synchronous>, transform_indices = @transform_6, window_bounds = array<i64: 1, 256>}, {transform_indices = @transform_7, window_bounds = array<i64: 8, 4>}, {transform_indices = @transform_8, window_bounds = array<i64: 8, 4>}]} {
    %c0 = arith.constant 0 : index
    %c0_0 = arith.constant 0 : index
    %0 = vector.load %arg1[%c0, %c0_0] : memref<8x32xf32, #tpu.memory_space<vmem>>, vector<8x32xf32>
    %c0_1 = arith.constant 0 : index
    %c0_2 = arith.constant 0 : index
    %1 = vector.load %arg2[%c0_1, %c0_2] : memref<32x256xf32, #tpu.memory_space<vmem>>, vector<32x256xf32>
    %cst = arith.constant dense<0.000000e+00> : vector<8x256xf32>
    %2 = tpu.matmul %0, %1, %cst {dimension_numbers = #tpu.dot_dimension_numbers<[1], [0], [0], [1], [0, 0, 1, 1], [], []>} : vector<8x32xf32>, vector<32x256xf32>, vector<8x256xf32> -> vector<8x256xf32>
    %c0_3 = arith.constant 0 : index
    %c0_4 = arith.constant 0 : index
    %3 = vector.load %arg3[%c0_3, %c0_4] : memref<1x256xf32, #tpu.memory_space<vmem>>, vector<1x256xf32>
    %4 = vector.broadcast %3 : vector<1x256xf32> to vector<8x256xf32>
    %5 = arith.addf %2, %4 : vector<8x256xf32>
    %cst_5 = arith.constant 0.000000e+00 : f32
    %6 = vector.broadcast %cst_5 : f32 to vector<8x256xf32>
    %7 = arith.maximumf %5, %6 : vector<8x256xf32>
    %c0_6 = arith.constant 0 : index
    %c0_7 = arith.constant 0 : index
    %8 = vector.load %arg4[%c0_6, %c0_7] : memref<256x128xf32, #tpu.memory_space<vmem>>, vector<256x128xf32>
    %cst_8 = arith.constant dense<0.000000e+00> : vector<8x128xf32>
    %9 = tpu.matmul %7, %8, %cst_8 {dimension_numbers = #tpu.dot_dimension_numbers<[1], [0], [0], [1], [0, 0, 1, 1], [], []>} : vector<8x256xf32>, vector<256x128xf32>, vector<8x128xf32> -> vector<8x128xf32>
    %c0_9 = arith.constant 0 : index
    %c0_10 = arith.constant 0 : index
    %10 = vector.load %arg5[%c0_9, %c0_10] : memref<1x128xf32, #tpu.memory_space<vmem>>, vector<1x128xf32>
    %11 = vector.broadcast %10 : vector<1x128xf32> to vector<8x128xf32>
    %12 = arith.addf %9, %11 : vector<8x128xf32>
    %cst_11 = arith.constant 0.000000e+00 : f32
    %13 = vector.broadcast %cst_11 : f32 to vector<8x128xf32>
    %14 = arith.maximumf %12, %13 : vector<8x128xf32>
    %c0_12 = arith.constant 0 : index
    %c0_13 = arith.constant 0 : index
    %15 = vector.load %arg6[%c0_12, %c0_13] : memref<128x256xf32, #tpu.memory_space<vmem>>, vector<128x256xf32>
    %cst_14 = arith.constant dense<0.000000e+00> : vector<8x256xf32>
    %16 = tpu.matmul %14, %15, %cst_14 {dimension_numbers = #tpu.dot_dimension_numbers<[1], [0], [0], [1], [0, 0, 1, 1], [], []>} : vector<8x128xf32>, vector<128x256xf32>, vector<8x256xf32> -> vector<8x256xf32>
    %c0_15 = arith.constant 0 : index
    %c0_16 = arith.constant 0 : index
    %17 = vector.load %arg7[%c0_15, %c0_16] : memref<1x256xf32, #tpu.memory_space<vmem>>, vector<1x256xf32>
    %18 = vector.broadcast %17 : vector<1x256xf32> to vector<8x256xf32>
    %19 = arith.addf %16, %18 : vector<8x256xf32>
    %20 = vector.extract_strided_slice %19 {offsets = [0, 0], sizes = [8, 4], strides = [1, 1]} : vector<8x256xf32> to vector<8x4xf32>
    %c0_17 = arith.constant 0 : index
    %c0_18 = arith.constant 0 : index
    %21 = vector.load %arg8[%c0_17, %c0_18] : memref<8x4xf32, #tpu.memory_space<vmem>>, vector<8x4xf32>
    tpu.vector_store %arg8[%c0_17, %c0_18], %20 {strides = array<i32>} : memref<8x4xf32, #tpu.memory_space<vmem>>, vector<8x4xf32>,
    %22 = vector.extract_strided_slice %19 {offsets = [0, 128], sizes = [8, 4], strides = [1, 1]} : vector<8x256xf32> to vector<8x4xf32>
    %23 = math.tanh %22 : vector<8x4xf32>
    %cst_19 = arith.constant 1.000000e+00 : f32
    %24 = vector.broadcast %cst_19 : f32 to vector<8x4xf32>
    %25 = arith.addf %23, %24 : vector<8x4xf32>
    %cst_20 = arith.constant 3.500000e+00 : f32
    %26 = vector.broadcast %cst_20 : f32 to vector<8x4xf32>
    %27 = arith.mulf %26, %25 : vector<8x4xf32>
    %cst_21 = arith.constant -5.000000e+00 : f32
    %28 = vector.broadcast %cst_21 : f32 to vector<8x4xf32>
    %29 = arith.addf %28, %27 : vector<8x4xf32>
    %c0_22 = arith.constant 0 : index
    %c0_23 = arith.constant 0 : index
    %30 = vector.load %arg9[%c0_22, %c0_23] : memref<8x4xf32, #tpu.memory_space<vmem>>, vector<8x4xf32>
    tpu.vector_store %arg9[%c0_22, %c0_23], %29 {strides = array<i32>} : memref<8x4xf32, #tpu.memory_space<vmem>>, vector<8x4xf32>,
    return
  }
  func.func @transform_0(%arg0: i32) -> (i32, i32) {
    %c0_i32 = arith.constant 0 : i32
    %c0_i32_0 = arith.constant 0 : i32
    return %arg0, %c0_i32 : i32, i32
  }
  func.func @transform_1(%arg0: i32) -> (i32, i32) {
    %c0_i32 = arith.constant 0 : i32
    %c0_i32_0 = arith.constant 0 : i32
    %c0_i32_1 = arith.constant 0 : i32
    return %c0_i32, %c0_i32_0 : i32, i32
  }
  func.func @transform_2(%arg0: i32) -> (i32, i32) {
    %c0_i32 = arith.constant 0 : i32
    %c0_i32_0 = arith.constant 0 : i32
    %c0_i32_1 = arith.constant 0 : i32
    return %c0_i32, %c0_i32_0 : i32, i32
  }
  func.func @transform_3(%arg0: i32) -> (i32, i32) {
    %c0_i32 = arith.constant 0 : i32
    %c0_i32_0 = arith.constant 0 : i32
    %c0_i32_1 = arith.constant 0 : i32
    return %c0_i32, %c0_i32_0 : i32, i32
  }
  func.func @transform_4(%arg0: i32) -> (i32, i32) {
    %c0_i32 = arith.constant 0 : i32
    %c0_i32_0 = arith.constant 0 : i32
    %c0_i32_1 = arith.constant 0 : i32
    return %c0_i32, %c0_i32_0 : i32, i32
  }
  func.func @transform_5(%arg0: i32) -> (i32, i32) {
    %c0_i32 = arith.constant 0 : i32
    %c0_i32_0 = arith.constant 0 : i32
    %c0_i32_1 = arith.constant 0 : i32
    return %c0_i32, %c0_i32_0 : i32, i32
  }
  func.func @transform_6(%arg0: i32) -> (i32, i32) {
    %c0_i32 = arith.constant 0 : i32
    %c0_i32_0 = arith.constant 0 : i32
    %c0_i32_1 = arith.constant 0 : i32
    return %c0_i32, %c0_i32_0 : i32, i32
  }
  func.func @transform_7(%arg0: i32) -> (i32, i32) {
    %c0_i32 = arith.constant 0 : i32
    %c0_i32_0 = arith.constant 0 : i32
    return %arg0, %c0_i32 : i32, i32
  }
  func.func @transform_8(%arg0: i32) -> (i32, i32) {
    %c0_i32 = arith.constant 0 : i32
    %c0_i32_0 = arith.constant 0 : i32
    return %arg0, %c0_i32 : i32, i32
  }
}

</mosaic_0001>

<llo_original>
// kernel: tpu_custom_call.1
$region0: #{tpu_custom_call.1}
  #allocation0 [shape = 'u32[]', space=smem, size = 0x4, offset = 0x4, fixed_abs, tag = 'smem constant byte address 0x4 - core index']
  #allocation1 [shape = 'u32[72,128]{1,0:T(1,128)}', space=vmem, size = 0x9000, scoped, tag = 'internal scratch']
  %s0 = inlined_call_operand.hbm [shape: f32[8,32], index: 0, kind: input, shape index: {}]
  %s1 = inlined_call_operand.hbm [shape: f32[32,256], index: 1, kind: input, shape index: {}]
  %s2 = inlined_call_operand.hbm [shape: f32[1,256], index: 2, kind: input, shape index: {}]
  %s3 = inlined_call_operand.hbm [shape: f32[256,128], index: 3, kind: input, shape index: {}]
  %s4 = inlined_call_operand.vmem [shape: f32[1,128], index: 4, kind: input, shape index: {}]
  %s5 = inlined_call_operand.hbm [shape: f32[128,256], index: 5, kind: input, shape index: {}]
  %s6 = inlined_call_operand.vmem [shape: f32[1,256], index: 6, kind: input, shape index: {}]
  %s7 = inlined_call_operand.vmem [shape: f32[8,4], index: 7, kind: output, shape index: {0}]
  %s8 = inlined_call_operand.vmem [shape: f32[8,4], index: 8, kind: output, shape index: {1}]
  %9 = xla_tuple %s7, %s8
  %s10 = sld [smem:[#allocation0]]
  $region66: #{tpu_custom_call.1} parent=0
    _
  %s12 = ssub.s32 1, %s10
  %s13 = scalar_select 0, %s12, %s10
  $region1: #{tpu_custom_call.1} parent=0
    #allocation2 [shape = 'u8[4096]{0}', space=vmem, size = 0x1000, scoped, tag = 'input window, operand 0, single buffered']
    #allocation3 [shape = 's32[1]{0}', space=sflag, size = 0x4, scoped, tag = 'scoped memory for tpu_custom_call.1']
    #allocation4 [shape = 'u8[32768]{0}', space=vmem, size = 0x8000, scoped, tag = 'input window, operand 1, single buffered']
    #allocation5 [shape = 's32[1]{0}', space=sflag, size = 0x4, scoped, tag = 'scoped memory for tpu_custom_call.1']
    #allocation6 [shape = 'u8[1024]{0}', space=vmem, size = 0x400, scoped, tag = 'input window, operand 2, single buffered']
    #allocation7 [shape = 'u8[131072]{0}', space=vmem, size = 0x20000, scoped, tag = 'input window, operand 3, single buffered']
    #allocation8 [shape = 's32[1]{0}', space=sflag, size = 0x4, scoped, tag = 'scoped memory for tpu_custom_call.1']
    #allocation9 [shape = 'u8[131072]{0}', space=vmem, size = 0x20000, scoped, tag = 'input window, operand 5, single buffered']
    %14 = vsyncpa [#allocation3], 0
    %15 = vsyncpa [#allocation5], 0
    %16 = vsyncpa [#allocation8], 0
    // Predicated region
    $region2: #{tpu_custom_call.1} parent=1 // pred_check
      _
    $region3: #{tpu_custom_call.1} parent=1 // pred_check_branch
      %18 = sbr.rel (0) target = $region5
    $region4: #{tpu_custom_call.1} parent=1 // pred_region
      %20 = vsyncadd [#allocation3], 0
      %s22 = sshll.u32 %s0, 4
      %s23 = int_to_ptr.hbm [resolvable:$true] %s22
      %s24 = sshll.u32 [#allocation2], 4
      %s25 = int_to_ptr.vmem [resolvable:$true] %s24
      %27 = dma.hbm_to_vmem [thread:$0]  %s23, 128, %s25, [#allocation3]
    $region5: #{tpu_custom_call.1} parent=1 // pred_fallthru
      _
    // Predicated region
    $region6: #{tpu_custom_call.1} parent=1 // pred_check
      _
    $region7: #{tpu_custom_call.1} parent=1 // pred_check_branch
      %29 = sbr.rel (0) target = $region9
    $region8: #{tpu_custom_call.1} parent=1 // pred_region
      %31 = vsyncadd [#allocation5], 0
      %s32 = sshll.u32 %s1, 4
      %s33 = int_to_ptr.hbm [resolvable:$true] %s32
      %s34 = sshll.u32 [#allocation4], 4
      %s35 = int_to_ptr.vmem [resolvable:$true] %s34
      %40 = dma.hbm_to_vmem [thread:$0]  %s33, 1024, %s35, [#allocation5], 256, 256, 16
    $region9: #{tpu_custom_call.1} parent=1 // pred_fallthru
      _
    // Predicated region
    $region10: #{tpu_custom_call.1} parent=1 // pred_check
      _
    $region11: #{tpu_custom_call.1} parent=1 // pred_check_branch
      %42 = sbr.rel (0) target = $region13
    $region12: #{tpu_custom_call.1} parent=1 // pred_region
      %44 = vsyncadd [#allocation5], 0
      %s46 = sshll.u32 %s2, 4
      %s47 = int_to_ptr.hbm [resolvable:$true] %s46
      %s48 = sshll.u32 [#allocation6], 4
      %s49 = int_to_ptr.vmem [resolvable:$true] %s48
      %51 = dma.hbm_to_vmem [thread:$0]  %s47, 32, %s49, [#allocation5]
    $region13: #{tpu_custom_call.1} parent=1 // pred_fallthru
      _
    // Predicated region
    $region14: #{tpu_custom_call.1} parent=1 // pred_check
      _
    $region15: #{tpu_custom_call.1} parent=1 // pred_check_branch
      %53 = sbr.rel (0) target = $region17
    $region16: #{tpu_custom_call.1} parent=1 // pred_region
      %55 = vsyncadd [#allocation8], 0
      %s56 = sshll.u32 %s3, 4
      %s57 = int_to_ptr.hbm [resolvable:$true] %s56
      %s58 = sshll.u32 [#allocation7], 4
      %s59 = int_to_ptr.vmem [resolvable:$true] %s58
      %64 = dma.hbm_to_vmem [thread:$0]  %s57, 4096, %s59, [#allocation8], 128, 128, 8
    $region17: #{tpu_custom_call.1} parent=1 // pred_fallthru
      _
    // Predicated region
    $region18: #{tpu_custom_call.1} parent=1 // pred_check
      _
    $region19: #{tpu_custom_call.1} parent=1 // pred_check_branch
      %66 = sbr.rel (0) target = $region21
    $region20: #{tpu_custom_call.1} parent=1 // pred_region
      _
    $region21: #{tpu_custom_call.1} parent=1 // pred_fallthru
      _
    // Predicated region
    $region22: #{tpu_custom_call.1} parent=1 // pred_check
      _
    $region23: #{tpu_custom_call.1} parent=1 // pred_check_branch
      %68 = sbr.rel (0) target = $region25
    $region24: #{tpu_custom_call.1} parent=1 // pred_region
      %70 = vsyncadd [#allocation8], 0
      %s71 = sshll.u32 %s5, 4
      %s72 = int_to_ptr.hbm [resolvable:$true] %s71
      %s73 = sshll.u32 [#allocation9], 4
      %s74 = int_to_ptr.vmem [resolvable:$true] %s73
      %79 = dma.hbm_to_vmem [thread:$0]  %s72, 4096, %s74, [#allocation8], 256, 256, 16
    $region25: #{tpu_custom_call.1} parent=1 // pred_fallthru
      _
    // Predicated region
    $region26: #{tpu_custom_call.1} parent=1 // pred_check
      _
    $region27: #{tpu_custom_call.1} parent=1 // pred_check_branch
      %81 = sbr.rel (0) target = $region29
    $region28: #{tpu_custom_call.1} parent=1 // pred_region
      _
    $region29: #{tpu_custom_call.1} parent=1 // pred_fallthru
      _
    // Predicated region
    $region30: #{tpu_custom_call.1} parent=1 // pred_check
      _
    $region31: #{tpu_custom_call.1} parent=1 // pred_check_branch
      %83 = sbr.rel (0) target = $region33
    $region32: #{tpu_custom_call.1} parent=1 // pred_region
      %85 = dma.done [#allocation3], 128
    $region33: #{tpu_custom_call.1} parent=1 // pred_fallthru
      _
    // Predicated region
    $region34: #{tpu_custom_call.1} parent=1 // pred_check
      _
    $region35: #{tpu_custom_call.1} parent=1 // pred_check_branch
      %87 = sbr.rel (0) target = $region37
    $region36: #{tpu_custom_call.1} parent=1 // pred_region
      %89 = dma.done [#allocation5], 1024
    $region37: #{tpu_custom_call.1} parent=1 // pred_fallthru
      _
    // Predicated region
    $region38: #{tpu_custom_call.1} parent=1 // pred_check
      _
    $region39: #{tpu_custom_call.1} parent=1 // pred_check_branch
      %91 = sbr.rel (0) target = $region41
    $region40: #{tpu_custom_call.1} parent=1 // pred_region
      %93 = dma.done [#allocation5], 32
    $region41: #{tpu_custom_call.1} parent=1 // pred_fallthru
      _
    // Predicated region
    $region42: #{tpu_custom_call.1} parent=1 // pred_check
      _
    $region43: #{tpu_custom_call.1} parent=1 // pred_check_branch
      %95 = sbr.rel (0) target = $region45
    $region44: #{tpu_custom_call.1} parent=1 // pred_region
      %97 = dma.done [#allocation8], 4096
    $region45: #{tpu_custom_call.1} parent=1 // pred_fallthru
      _
    // Predicated region
    $region46: #{tpu_custom_call.1} parent=1 // pred_check
      _
    $region47: #{tpu_custom_call.1} parent=1 // pred_check_branch
      %99 = sbr.rel (0) target = $region49
    $region48: #{tpu_custom_call.1} parent=1 // pred_region
      %101 = dma.done [#allocation8], 4096
    $region49: #{tpu_custom_call.1} parent=1 // pred_fallthru
      _
    %v102 = vld [vmem:[#allocation2] sm:$0xff]
    %v103 = vld [vmem:[#allocation4] sm:$0xff]
    %v104 = vld [vmem:[#allocation4 + $0x8] sm:$0xff]
    %v105 = vld [vmem:[#allocation4 + $0x10] sm:$0xff]
    %v106 = vld [vmem:[#allocation4 + $0x18] sm:$0xff]
    %v107 = vld [vmem:[#allocation4 + $0x20] sm:$0xff]
    %v108 = vld [vmem:[#allocation4 + $0x28] sm:$0xff]
    %v109 = vld [vmem:[#allocation4 + $0x30] sm:$0xff]
    %v110 = vld [vmem:[#allocation4 + $0x38] sm:$0xff]
    %v111 = vld [vmem:[#allocation6] sm:$0x3]
    %v113 = vperm.slane %v111, 0
    %v114 = vperm.slane %v111, 1
    %vm117 = vcmask 261120
    %v119 = vsel %vm117, %v102, 0
    %121 = vmatpush.msra.mxu0 0.0
    %122 = vmatpush.msra.mxu0 0.0
    %123 = vmatpush.msra.mxu0 0.0
    %124 = vmatpush.msra.mxu0 0.0
    %125 = vmatpush.msra.mxu0 0.0
    %126 = vmatpush.msra.mxu0 0.0
    %127 = vmatpush.msra.mxu0 0.0
    %128 = vmatpush.msra.mxu0 0.0
    %129 = vmatpush.msra.mxu0 0.0
    %130 = vmatpush.msra.mxu0 0.0
    %131 = vmatpush.msra.mxu0 0.0
    %132 = vmatpush.msra.mxu0 0.0
    %133 = vmatpush.msra.mxu0 %v109
    %134 = vmatpush.msra.mxu0 %v107
    %135 = vmatpush.msra.mxu0 %v105
    %136 = vmatpush.msra.mxu0 %v103
    %137 = vmatmul.f32.gmra.mxu0 %v119
    %v138 = vpop.f32.mrf.mxu0
    %v139 = vadd.f32 %v113, %v138
    %140 = vdwg.mxu0
    %141 = vmatpush.msra.mxu0 0.0
    %142 = vmatpush.msra.mxu0 0.0
    %143 = vmatpush.msra.mxu0 0.0
    %144 = vmatpush.msra.mxu0 0.0
    %145 = vmatpush.msra.mxu0 0.0
    %146 = vmatpush.msra.mxu0 0.0
    %147 = vmatpush.msra.mxu0 0.0
    %148 = vmatpush.msra.mxu0 0.0
    %149 = vmatpush.msra.mxu0 0.0
    %150 = vmatpush.msra.mxu0 0.0
    %151 = vmatpush.msra.mxu0 0.0
    %152 = vmatpush.msra.mxu0 0.0
    %153 = vmatpush.msra.mxu0 %v110
    %154 = vmatpush.msra.mxu0 %v108
    %155 = vmatpush.msra.mxu0 %v106
    %156 = vmatpush.msra.mxu0 %v104
    %157 = vmatmul.f32.gmra.mxu0 %v119
    %v158 = vpop.f32.mrf.mxu0
    %v159 = vadd.f32 %v114, %v158
    %160 = vdwg.mxu0
    %v161 = vmax.f32 %v139, 0.0
    %v162 = vmax.f32 %v159, 0.0
    %v163 = vld [vmem:[#allocation7] sm:$0xff]
    %v164 = vld [vmem:[#allocation7 + $0x8] sm:$0xff]
    %v165 = vld [vmem:[#allocation7 + $0x10] sm:$0xff]
    %v166 = vld [vmem:[#allocation7 + $0x18] sm:$0xff]
    %v167 = vld [vmem:[#allocation7 + $0x20] sm:$0xff]
    %v168 = vld [vmem:[#allocation7 + $0x28] sm:$0xff]
    %v169 = vld [vmem:[#allocation7 + $0x30] sm:$0xff]
    %v170 = vld [vmem:[#allocation7 + $0x38] sm:$0xff]
    %v171 = vld [vmem:[#allocation7 + $0x40] sm:$0xff]
    %v172 = vld [vmem:[#allocation7 + $0x48] sm:$0xff]
    %v173 = vld [vmem:[#allocation7 + $0x50] sm:$0xff]
    %v174 = vld [vmem:[#allocation7 + $0x58] sm:$0xff]
    %v175 = vld [vmem:[#allocation7 + $0x60] sm:$0xff]
    %v176 = vld [vmem:[#allocation7 + $0x68] sm:$0xff]
    %v177 = vld [vmem:[#allocation7 + $0x70] sm:$0xff]
    %v178 = vld [vmem:[#allocation7 + $0x78] sm:$0xff]
    %v179 = vld [vmem:[#allocation7 + $0x80] sm:$0xff]
    %v180 = vld [vmem:[#allocation7 + $0x88] sm:$0xff]
    %v181 = vld [vmem:[#allocation7 + $0x90] sm:$0xff]
    %v182 = vld [vmem:[#allocation7 + $0x98] sm:$0xff]
    %v183 = vld [vmem:[#allocation7 + $0xa0] sm:$0xff]
    %v184 = vld [vmem:[#allocation7 + $0xa8] sm:$0xff]
    %v185 = vld [vmem:[#allocation7 + $0xb0] sm:$0xff]
    %v186 = vld [vmem:[#allocation7 + $0xb8] sm:$0xff]
    %v187 = vld [vmem:[#allocation7 + $0xc0] sm:$0xff]
    %v188 = vld [vmem:[#allocation7 + $0xc8] sm:$0xff]
    %v189 = vld [vmem:[#allocation7 + $0xd0] sm:$0xff]
    %v190 = vld [vmem:[#allocation7 + $0xd8] sm:$0xff]
    %v191 = vld [vmem:[#allocation7 + $0xe0] sm:$0xff]
    %v192 = vld [vmem:[#allocation7 + $0xe8] sm:$0xff]
    %v193 = vld [vmem:[#allocation7 + $0xf0] sm:$0xff]
    %v194 = vld [vmem:[#allocation7 + $0xf8] sm:$0xff]
    %v195 = vld [vmem:[%s4] sm:$0x1]
    %v197 = vperm.slane %v195, 0
    %199 = vmatpush.msra.mxu0 %v178
    %200 = vmatpush.msra.mxu0 %v177
    %201 = vmatpush.msra.mxu0 %v176
    %202 = vmatpush.msra.mxu0 %v175
    %203 = vmatpush.msra.mxu0 %v174
    %204 = vmatpush.msra.mxu0 %v173
    %205 = vmatpush.msra.mxu0 %v172
    %206 = vmatpush.msra.mxu0 %v171
    %207 = vmatpush.msra.mxu0 %v170
    %208 = vmatpush.msra.mxu0 %v169
    %209 = vmatpush.msra.mxu0 %v168
    %210 = vmatpush.msra.mxu0 %v167
    %211 = vmatpush.msra.mxu0 %v166
    %212 = vmatpush.msra.mxu0 %v165
    %213 = vmatpush.msra.mxu0 %v164
    %214 = vmatpush.msra.mxu0 %v163
    %215 = vmatmul.f32.gmra.mxu0 %v161
    %v216 = vpop.f32.mrf.mxu0
    %v217 = vadd.f32 %v197, %v216
    %218 = vdwg.mxu0
    %219 = vmatpush.msra.mxu0 %v194
    %220 = vmatpush.msra.mxu0 %v193
    %221 = vmatpush.msra.mxu0 %v192
    %222 = vmatpush.msra.mxu0 %v191
    %223 = vmatpush.msra.mxu0 %v190
    %224 = vmatpush.msra.mxu0 %v189
    %225 = vmatpush.msra.mxu0 %v188
    %226 = vmatpush.msra.mxu0 %v187
    %227 = vmatpush.msra.mxu0 %v186
    %228 = vmatpush.msra.mxu0 %v185
    %229 = vmatpush.msra.mxu0 %v184
    %230 = vmatpush.msra.mxu0 %v183
    %231 = vmatpush.msra.mxu0 %v182
    %232 = vmatpush.msra.mxu0 %v181
    %233 = vmatpush.msra.mxu0 %v180
    %234 = vmatpush.msra.mxu0 %v179
    %235 = vmatmul.f32.gmra.mxu0 %v162
    %v236 = vpop.f32.mrf.mxu0
    %v237 = vadd.f32 %v217, %v236
    %238 = vdwg.mxu0
    %v239 = vmax.f32 %v237, 0.0
    %v240 = vld [vmem:[#allocation9] sm:$0xff]
    %v241 = vld [vmem:[#allocation9 + $0x8] sm:$0xff]
    %v242 = vld [vmem:[#allocation9 + $0x10] sm:$0xff]
    %v243 = vld [vmem:[#allocation9 + $0x18] sm:$0xff]
    %v244 = vld [vmem:[#allocation9 + $0x20] sm:$0xff]
    %v245 = vld [vmem:[#allocation9 + $0x28] sm:$0xff]
    %v246 = vld [vmem:[#allocation9 + $0x30] sm:$0xff]
    %v247 = vld [vmem:[#allocation9 + $0x38] sm:$0xff]
    %v248 = vld [vmem:[#allocation9 + $0x40] sm:$0xff]
    %v249 = vld [vmem:[#allocation9 + $0x48] sm:$0xff]
    %v250 = vld [vmem:[#allocation9 + $0x50] sm:$0xff]
    %v251 = vld [vmem:[#allocation9 + $0x58] sm:$0xff]
    %v252 = vld [vmem:[#allocation9 + $0x60] sm:$0xff]
    %v253 = vld [vmem:[#allocation9 + $0x68] sm:$0xff]
    %v254 = vld [vmem:[#allocation9 + $0x70] sm:$0xff]
    %v255 = vld [vmem:[#allocation9 + $0x78] sm:$0xff]
    %v256 = vld [vmem:[#allocation9 + $0x80] sm:$0xff]
    %v257 = vld [vmem:[#allocation9 + $0x88] sm:$0xff]
    %v258 = vld [vmem:[#allocation9 + $0x90] sm:$0xff]
    %v259 = vld [vmem:[#allocation9 + $0x98] sm:$0xff]
    %v260 = vld [vmem:[#allocation9 + $0xa0] sm:$0xff]
    %v261 = vld [vmem:[#allocation9 + $0xa8] sm:$0xff]
    %v262 = vld [vmem:[#allocation9 + $0xb0] sm:$0xff]
    %v263 = vld [vmem:[#allocation9 + $0xb8] sm:$0xff]
    %v264 = vld [vmem:[#allocation9 + $0xc0] sm:$0xff]
    %v265 = vld [vmem:[#allocation9 + $0xc8] sm:$0xff]
    %v266 = vld [vmem:[#allocation9 + $0xd0] sm:$0xff]
    %v267 = vld [vmem:[#allocation9 + $0xd8] sm:$0xff]
    %v268 = vld [vmem:[#allocation9 + $0xe0] sm:$0xff]
    %v269 = vld [vmem:[#allocation9 + $0xe8] sm:$0xff]
    %v270 = vld [vmem:[#allocation9 + $0xf0] sm:$0xff]
    %v271 = vld [vmem:[#allocation9 + $0xf8] sm:$0xff]
    %v272 = vld [vmem:[%s6] sm:$0x3]
    %v274 = vperm.slane %v272, 0
    %v275 = vperm.slane %v272, 1
    %278 = vmatpush.msra.mxu0 %v270
    %279 = vmatpush.msra.mxu0 %v268
    %280 = vmatpush.msra.mxu0 %v266
    %281 = vmatpush.msra.mxu0 %v264
    %282 = vmatpush.msra.mxu0 %v262
    %283 = vmatpush.msra.mxu0 %v260
    %284 = vmatpush.msra.mxu0 %v258
    %285 = vmatpush.msra.mxu0 %v256
    %286 = vmatpush.msra.mxu0 %v254
    %287 = vmatpush.msra.mxu0 %v252
    %288 = vmatpush.msra.mxu0 %v250
    %289 = vmatpush.msra.mxu0 %v248
    %290 = vmatpush.msra.mxu0 %v246
    %291 = vmatpush.msra.mxu0 %v244
    %292 = vmatpush.msra.mxu0 %v242
    %293 = vmatpush.msra.mxu0 %v240
    %294 = vmatmul.f32.gmra.mxu0 %v239
    %v295 = vpop.f32.mrf.mxu0
    %v296 = vadd.f32 %v274, %v295
    %297 = vdwg.mxu0
    %298 = vmatpush.msra.mxu0 %v271
    %299 = vmatpush.msra.mxu0 %v269
    %300 = vmatpush.msra.mxu0 %v267
    %301 = vmatpush.msra.mxu0 %v265
    %302 = vmatpush.msra.mxu0 %v263
    %303 = vmatpush.msra.mxu0 %v261
    %304 = vmatpush.msra.mxu0 %v259
    %305 = vmatpush.msra.mxu0 %v257
    %306 = vmatpush.msra.mxu0 %v255
    %307 = vmatpush.msra.mxu0 %v253
    %308 = vmatpush.msra.mxu0 %v251
    %309 = vmatpush.msra.mxu0 %v249
    %310 = vmatpush.msra.mxu0 %v247
    %311 = vmatpush.msra.mxu0 %v245
    %312 = vmatpush.msra.mxu0 %v243
    %313 = vmatpush.msra.mxu0 %v241
    %314 = vmatmul.f32.gmra.mxu0 %v239
    %v315 = vpop.f32.mrf.mxu0
    %v316 = vadd.f32 %v275, %v315
    %317 = vdwg.mxu0
    %vm318 = vcmask 31744
    %319 = vst.msk [vmem:[%s7] sm:$0xff] %vm318, %v296
    %v320 = vtanh.pop %v316
    %v321 = vadd.f32 %v320, 1.0
    %v322 = vmul.f32 %v321, 3.5
    %v323 = vadd.f32 %v322, -5.0
    %324 = vst.msk [vmem:[%s8] sm:$0xff] %vm318, %v323
    // Predicated region
    $region50: #{tpu_custom_call.1} parent=1 // pred_check
      _
    $region51: #{tpu_custom_call.1} parent=1 // pred_check_branch
      %326 = sbr.rel (0) target = $region53
    $region52: #{tpu_custom_call.1} parent=1 // pred_region
      _
    $region53: #{tpu_custom_call.1} parent=1 // pred_fallthru
      _
    // Predicated region
    $region54: #{tpu_custom_call.1} parent=1 // pred_check
      _
    $region55: #{tpu_custom_call.1} parent=1 // pred_check_branch
      %328 = sbr.rel (0) target = $region57
    $region56: #{tpu_custom_call.1} parent=1 // pred_region
      _
    $region57: #{tpu_custom_call.1} parent=1 // pred_fallthru
      _
    // Predicated region
    $region58: #{tpu_custom_call.1} parent=1 // pred_check
      _
    $region59: #{tpu_custom_call.1} parent=1 // pred_check_branch
      %330 = sbr.rel (0) target = $region61
    $region60: #{tpu_custom_call.1} parent=1 // pred_region
      _
    $region61: #{tpu_custom_call.1} parent=1 // pred_fallthru
      _
    // Predicated region
    $region62: #{tpu_custom_call.1} parent=1 // pred_check
      _
    $region63: #{tpu_custom_call.1} parent=1 // pred_check_branch
      %332 = sbr.rel (0) target = $region65
    $region64: #{tpu_custom_call.1} parent=1 // pred_region
      _
    $region65: #{tpu_custom_call.1} parent=1 // pred_fallthru
      _
    %333 = vsyncpa [#allocation3], 1
    %334 = vsyncpa [#allocation5], 1
    %335 = vsyncpa [#allocation8], 1

</llo_original>
